<compile_context>
chip_gen: v6e
topology: v6e:2x2x1
jax: 0.10.0
libtpu: 0.0.40
codegen_flags: <defaults>
</compile_context>

<pallas_src>
import jax
import jax.numpy as jnp
from jax import lax
from jax.experimental import pallas as pl
from jax.experimental.pallas import tpu as pltpu


def _round_up(x, m):
    return ((x + m - 1) // m) * m


def _fused_linear_relu_kernel(x1_ref, x2_ref, wa_ref, wb_ref, b_ref, o_ref):
    # o = relu(x1_pairs @ Wa^T + x2_pairs @ Wb^T + bias_pair)
    # dot_general contracts dim 1 of both operands, so the MXU consumes the
    # weights directly in their stored (out, in) orientation.
    dn = (((1,), (1,)), ((), ()))
    acc = lax.dot_general(x1_ref[...], wa_ref[...], dimension_numbers=dn,
                          preferred_element_type=jnp.float32)
    acc = acc + lax.dot_general(x2_ref[...], wb_ref[...], dimension_numbers=dn,
                                preferred_element_type=jnp.float32)
    # bias add + ReLU fused in a single VPU pass; b_ref is (1, 128).
    o_ref[...] = jnp.maximum(acc + b_ref[...], 0.0).astype(o_ref.dtype)


def pack_params(weight, bias):
    """One-time parameter packing (hoist out of the hot path).

    weight: (64, 128) PyTorch nn.Linear layout, bias: (64,).
    Returns Wa, Wb (128, 128) block-diagonal, row = output idx, col = contraction
    idx, and bias replicated to (1, 128) for the paired-row output layout.
    """
    out_f, in_total = weight.shape
    in_half = in_total // 2
    w1 = weight[:, :in_half]                       # x1 features -> out
    w2 = weight[:, in_half:]                       # x2 features -> out
    z = jnp.zeros_like(w1)
    wa = jnp.concatenate([jnp.concatenate([w1, z], axis=1),
                          jnp.concatenate([z, w1], axis=1)], axis=0)
    wb = jnp.concatenate([jnp.concatenate([w2, z], axis=1),
                          jnp.concatenate([z, w2], axis=1)], axis=0)
    b2 = jnp.concatenate([bias, bias]).reshape(1, 2 * out_f)
    return wa, wb, b2


def intermedia_forward(x1, x2, wa, wb, b2, *, block_pairs=512):
    """y = relu(cat([x1, x2], 1) @ W.T + b) with W,b pre-packed by pack_params."""
    B, in_half = x1.shape
    two_in = 2 * in_half          # 128
    two_out = b2.shape[1]         # 128
    out_f = two_out // 2          # 64
    dtype = x1.dtype

    # Pair up batch rows; pad so the pair count divides the tile (f32 sublane
    # tile = 8).  Padded rows compute relu(bias) and are sliced off at the end.
    half = (B + 1) // 2
    tr = min(block_pairs, _round_up(half, 8))      # pairs per grid step
    r_pad = _round_up(half, tr)
    b_pad = 2 * r_pad
    if b_pad != B:
        pad = b_pad - B
        x1 = jnp.pad(x1, ((0, pad), (0, 0)))
        x2 = jnp.pad(x2, ((0, pad), (0, 0)))
    x1r = x1.reshape(r_pad, two_in)                # free contiguous reshape
    x2r = x2.reshape(r_pad, two_in)

    grid = (r_pad // tr,)
    flops = 2 * 2 * r_pad * two_in * two_out       # two (tr,128)x(128,128) dots
    bytes_accessed = 4 * (2 * r_pad * two_in              # x1r + x2r reads
                          + 2 * two_in * two_out + two_out  # resident weights + bias
                          + r_pad * two_out)               # output write

    out_r = pl.pallas_call(
        _fused_linear_relu_kernel,
        out_shape=jax.ShapeDtypeStruct((r_pad, two_out), dtype),
        grid_spec=pltpu.PrefetchScalarGridSpec(
            num_scalar_prefetch=0,
            grid=grid,
            in_specs=[
                pl.BlockSpec((tr, two_in), lambda i: (i, 0)),       # x1 pairs
                pl.BlockSpec((tr, two_in), lambda i: (i, 0)),       # x2 pairs
                pl.BlockSpec((two_out, two_in), lambda i: (0, 0)),  # Wa (resident)
                pl.BlockSpec((two_out, two_in), lambda i: (0, 0)),  # Wb (resident)
                pl.BlockSpec((1, two_out), lambda i: (0, 0)),       # bias (resident)
            ],
            out_specs=pl.BlockSpec((tr, two_out), lambda i: (i, 0)),
        ),
        compiler_params=pltpu.CompilerParams(
            dimension_semantics=("parallel",)),                      # v7x: 2 TCs
        cost_estimate=pl.CostEstimate(
            flops=flops, transcendentals=0, bytes_accessed=bytes_accessed),
    )(x1r, x2r, wa, wb, b2)

    # Unfold paired rows back to (B, 64): again a free contiguous reshape.
    y = out_r.reshape(b_pad, out_f)
    return y[:B] if b_pad != B else y


if __name__ == "__main__":
    key = jax.random.PRNGKey(0)
    k1, k2, kw, kb = jax.random.split(key, 4)

    B = 8
    IN_HALF = 64          # x1 and x2 each contribute 64 features -> cat = 128
    IN_TOTAL = 128
    OUT = 64

    x1 = jax.random.normal(k1, (B, IN_HALF), dtype=jnp.float32)
    x2 = jax.random.normal(k2, (B, IN_HALF), dtype=jnp.float32)

    # Deterministic param init mimicking nn.Linear default: U(-1/sqrt(fan_in), ...)
    bound = 1.0 / jnp.sqrt(jnp.float32(IN_TOTAL))
    weight = jax.random.uniform(kw, (OUT, IN_TOTAL), dtype=jnp.float32,
                                minval=-bound, maxval=bound)
    bias = jax.random.uniform(kb, (OUT,), dtype=jnp.float32,
                              minval=-bound, maxval=bound)

    # One-time packing (outside the hot path), then a jitted forward.
    wa, wb, b2 = pack_params(weight, bias)
    fwd = jax.jit(intermedia_forward)

    y = jax.block_until_ready(fwd(x1, x2, wa, wb, b2))

    # Reference check against plain JAX (same semantics as the PyTorch module).
    x_cat = jnp.concatenate([x1, x2], axis=1)
    y_ref = jnp.maximum(x_cat @ weight.T + bias, 0.0)
    assert y.shape == (B, OUT)
    assert jnp.allclose(y, y_ref, atol=1e-5, rtol=1e-5)

    print("KERNEL_OK")
</pallas_src>

<mosaic_0001>
module attributes {stable_mosaic.version = 11 : i64} {
  func.func @_fused_linear_relu_kernel(%arg0: i32, %arg1: memref<8x128xf32, #tpu.memory_space<vmem>>, %arg2: memref<8x128xf32, #tpu.memory_space<vmem>>, %arg3: memref<128x128xf32, #tpu.memory_space<vmem>>, %arg4: memref<128x128xf32, #tpu.memory_space<vmem>>, %arg5: memref<1x128xf32, #tpu.memory_space<vmem>>, %arg6: memref<8x128xf32, #tpu.memory_space<vmem>>) attributes {dimension_semantics = [#tpu.dimension_semantics<parallel>], iteration_bounds = array<i64: 1>, scalar_prefetch = 0 : i64, scratch_operands = 0 : i64, tpu.core_type = #tpu.core_type<tc>, window_params = [{transform_indices = @transform_0, window_bounds = array<i64: 8, 128>}, {transform_indices = @transform_1, window_bounds = array<i64: 8, 128>}, {pipeline_mode = #tpu.pipeline_mode<synchronous>, transform_indices = @transform_2, window_bounds = array<i64: 128, 128>}, {pipeline_mode = #tpu.pipeline_mode<synchronous>, transform_indices = @transform_3, window_bounds = array<i64: 128, 128>}, {pipeline_mode = #tpu.pipeline_mode<synchronous>, transform_indices = @transform_4, window_bounds = array<i64: 1, 128>}, {transform_indices = @transform_5, window_bounds = array<i64: 8, 128>}]} {
    %c0 = arith.constant 0 : index
    %c0_0 = arith.constant 0 : index
    %0 = vector.load %arg1[%c0, %c0_0] : memref<8x128xf32, #tpu.memory_space<vmem>>, vector<8x128xf32>
    %c0_1 = arith.constant 0 : index
    %c0_2 = arith.constant 0 : index
    %1 = vector.load %arg3[%c0_1, %c0_2] : memref<128x128xf32, #tpu.memory_space<vmem>>, vector<128x128xf32>
    %cst = arith.constant dense<0.000000e+00> : vector<8x128xf32>
    %2 = tpu.matmul %0, %1, %cst {dimension_numbers = #tpu.dot_dimension_numbers<[1], [1], [0], [0], [0, 0, 1, 0], [], []>} : vector<8x128xf32>, vector<128x128xf32>, vector<8x128xf32> -> vector<8x128xf32>
    %c0_3 = arith.constant 0 : index
    %c0_4 = arith.constant 0 : index
    %3 = vector.load %arg2[%c0_3, %c0_4] : memref<8x128xf32, #tpu.memory_space<vmem>>, vector<8x128xf32>
    %c0_5 = arith.constant 0 : index
    %c0_6 = arith.constant 0 : index
    %4 = vector.load %arg4[%c0_5, %c0_6] : memref<128x128xf32, #tpu.memory_space<vmem>>, vector<128x128xf32>
    %cst_7 = arith.constant dense<0.000000e+00> : vector<8x128xf32>
    %5 = tpu.matmul %3, %4, %cst_7 {dimension_numbers = #tpu.dot_dimension_numbers<[1], [1], [0], [0], [0, 0, 1, 0], [], []>} : vector<8x128xf32>, vector<128x128xf32>, vector<8x128xf32> -> vector<8x128xf32>
    %6 = arith.addf %2, %5 : vector<8x128xf32>
    %c0_8 = arith.constant 0 : index
    %c0_9 = arith.constant 0 : index
    %7 = vector.load %arg5[%c0_8, %c0_9] : memref<1x128xf32, #tpu.memory_space<vmem>>, vector<1x128xf32>
    %8 = vector.broadcast %7 : vector<1x128xf32> to vector<8x128xf32>
    %9 = arith.addf %6, %8 : vector<8x128xf32>
    %cst_10 = arith.constant 0.000000e+00 : f32
    %10 = vector.broadcast %cst_10 : f32 to vector<8x128xf32>
    %11 = arith.maximumf %9, %10 : vector<8x128xf32>
    %c0_11 = arith.constant 0 : index
    %c0_12 = arith.constant 0 : index
    %12 = vector.load %arg6[%c0_11, %c0_12] : memref<8x128xf32, #tpu.memory_space<vmem>>, vector<8x128xf32>
    tpu.vector_store %arg6[%c0_11, %c0_12], %11 {strides = array<i32>} : memref<8x128xf32, #tpu.memory_space<vmem>>, vector<8x128xf32>,
    return
  }
  func.func @transform_0(%arg0: i32) -> (i32, i32) {
    %c0_i32 = arith.constant 0 : i32
    %c0_i32_0 = arith.constant 0 : i32
    return %arg0, %c0_i32 : i32, i32
  }
  func.func @transform_1(%arg0: i32) -> (i32, i32) {
    %c0_i32 = arith.constant 0 : i32
    %c0_i32_0 = arith.constant 0 : i32
    return %arg0, %c0_i32 : i32, i32
  }
  func.func @transform_2(%arg0: i32) -> (i32, i32) {
    %c0_i32 = arith.constant 0 : i32
    %c0_i32_0 = arith.constant 0 : i32
    %c0_i32_1 = arith.constant 0 : i32
    return %c0_i32, %c0_i32_0 : i32, i32
  }
  func.func @transform_3(%arg0: i32) -> (i32, i32) {
    %c0_i32 = arith.constant 0 : i32
    %c0_i32_0 = arith.constant 0 : i32
    %c0_i32_1 = arith.constant 0 : i32
    return %c0_i32, %c0_i32_0 : i32, i32
  }
  func.func @transform_4(%arg0: i32) -> (i32, i32) {
    %c0_i32 = arith.constant 0 : i32
    %c0_i32_0 = arith.constant 0 : i32
    %c0_i32_1 = arith.constant 0 : i32
    return %c0_i32, %c0_i32_0 : i32, i32
  }
  func.func @transform_5(%arg0: i32) -> (i32, i32) {
    %c0_i32 = arith.constant 0 : i32
    %c0_i32_0 = arith.constant 0 : i32
    return %arg0, %c0_i32 : i32, i32
  }
}

</mosaic_0001>

<llo_original>
// kernel: intermedia_forward.1
$region0: #{intermedia_forward.1}
  #allocation0 [shape = 'u32[]', space=smem, size = 0x4, offset = 0x4, fixed_abs, tag = 'smem constant byte address 0x4 - core index']
  #allocation1 [shape = 'u32[144,128]{1,0:T(1,128)}', space=vmem, size = 0x12000, scoped, tag = 'internal scratch']
  %s0 = inlined_call_operand.vmem [shape: f32[8,128], index: 0, kind: input, shape index: {}]
  %s1 = inlined_call_operand.vmem [shape: f32[8,128], index: 1, kind: input, shape index: {}]
  %s2 = inlined_call_operand.hbm [shape: f32[128,128], index: 2, kind: input, shape index: {}]
  %s3 = inlined_call_operand.hbm [shape: f32[128,128], index: 3, kind: input, shape index: {}]
  %s4 = inlined_call_operand.vmem [shape: f32[1,128], index: 4, kind: input, shape index: {}]
  %s5 = inlined_call_operand.vmem [shape: f32[8,128], index: 5, kind: output, shape index: {}]
  %s6 = sld [smem:[#allocation0]]
  $region38: #{intermedia_forward.1} parent=0
    _
  %s8 = ssub.s32 1, %s6
  %s9 = scalar_select 0, %s8, %s6
  $region1: #{intermedia_forward.1} parent=0
    #allocation2 [shape = 'u8[65536]{0}', space=vmem, size = 0x10000, scoped, tag = 'input window, operand 2, single buffered']
    #allocation3 [shape = 's32[1]{0}', space=sflag, size = 0x4, scoped, tag = 'scoped memory for intermedia_forward.1']
    #allocation4 [shape = 'u8[65536]{0}', space=vmem, size = 0x10000, scoped, tag = 'input window, operand 3, single buffered']
    #allocation5 [shape = 's32[1]{0}', space=sflag, size = 0x4, scoped, tag = 'scoped memory for intermedia_forward.1']
    %10 = vsyncpa [#allocation3], 0
    %11 = vsyncpa [#allocation5], 0
    // Predicated region
    $region2: #{intermedia_forward.1} parent=1 // pred_check
      _
    $region3: #{intermedia_forward.1} parent=1 // pred_check_branch
      %13 = sbr.rel (0) target = $region5
    $region4: #{intermedia_forward.1} parent=1 // pred_region
      _
    $region5: #{intermedia_forward.1} parent=1 // pred_fallthru
      _
    // Predicated region
    $region6: #{intermedia_forward.1} parent=1 // pred_check
      _
    $region7: #{intermedia_forward.1} parent=1 // pred_check_branch
      %15 = sbr.rel (0) target = $region9
    $region8: #{intermedia_forward.1} parent=1 // pred_region
      _
    $region9: #{intermedia_forward.1} parent=1 // pred_fallthru
      _
    // Predicated region
    $region10: #{intermedia_forward.1} parent=1 // pred_check
      _
    $region11: #{intermedia_forward.1} parent=1 // pred_check_branch
      %17 = sbr.rel (0) target = $region13
    $region12: #{intermedia_forward.1} parent=1 // pred_region
      %s19 = ssub.s32 2048, 2048
      %20 = vsyncadd [#allocation3], %s19
      %s21 = sshll.u32 [#allocation2], 4
      %s22 = int_to_ptr.vmem [resolvable:$true] %s21
      %27 = dma.hbm_to_vmem [thread:$0]  %s2, 2048, %s22, [#allocation3], 128, 128, 8
    $region13: #{intermedia_forward.1} parent=1 // pred_fallthru
      _
    // Predicated region
    $region14: #{intermedia_forward.1} parent=1 // pred_check
      _
    $region15: #{intermedia_forward.1} parent=1 // pred_check_branch
      %29 = sbr.rel (0) target = $region17
    $region16: #{intermedia_forward.1} parent=1 // pred_region
      %s31 = ssub.s32 2048, 2048
      %32 = vsyncadd [#allocation5], %s31
      %s33 = sshll.u32 [#allocation4], 4
      %s34 = int_to_ptr.vmem [resolvable:$true] %s33
      %39 = dma.hbm_to_vmem [thread:$0]  %s3, 2048, %s34, [#allocation5], 128, 128, 8
    $region17: #{intermedia_forward.1} parent=1 // pred_fallthru
      _
    // Predicated region
    $region18: #{intermedia_forward.1} parent=1 // pred_check
      _
    $region19: #{intermedia_forward.1} parent=1 // pred_check_branch
      %41 = sbr.rel (0) target = $region21
    $region20: #{intermedia_forward.1} parent=1 // pred_region
      _
    $region21: #{intermedia_forward.1} parent=1 // pred_fallthru
      _
    // Predicated region
    $region22: #{intermedia_forward.1} parent=1 // pred_check
      _
    $region23: #{intermedia_forward.1} parent=1 // pred_check_branch
      %43 = sbr.rel (0) target = $region25
    $region24: #{intermedia_forward.1} parent=1 // pred_region
      %44 = dma.done [#allocation3], 2048
    $region25: #{intermedia_forward.1} parent=1 // pred_fallthru
      _
    // Predicated region
    $region26: #{intermedia_forward.1} parent=1 // pred_check
      _
    $region27: #{intermedia_forward.1} parent=1 // pred_check_branch
      %46 = sbr.rel (0) target = $region29
    $region28: #{intermedia_forward.1} parent=1 // pred_region
      %47 = dma.done [#allocation5], 2048
    $region29: #{intermedia_forward.1} parent=1 // pred_fallthru
      _
    %v48 = vld [vmem:[%s0] sm:$0xff]
    %v49 = vld [vmem:[#allocation2] sm:$0xff]
    %v50 = vld [vmem:[#allocation2 + $0x8] sm:$0xff]
    %v51 = vld [vmem:[#allocation2 + $0x10] sm:$0xff]
    %v52 = vld [vmem:[#allocation2 + $0x18] sm:$0xff]
    %v53 = vld [vmem:[#allocation2 + $0x20] sm:$0xff]
    %v54 = vld [vmem:[#allocation2 + $0x28] sm:$0xff]
    %v55 = vld [vmem:[#allocation2 + $0x30] sm:$0xff]
    %v56 = vld [vmem:[#allocation2 + $0x38] sm:$0xff]
    %v57 = vld [vmem:[#allocation2 + $0x40] sm:$0xff]
    %v58 = vld [vmem:[#allocation2 + $0x48] sm:$0xff]
    %v59 = vld [vmem:[#allocation2 + $0x50] sm:$0xff]
    %v60 = vld [vmem:[#allocation2 + $0x58] sm:$0xff]
    %v61 = vld [vmem:[#allocation2 + $0x60] sm:$0xff]
    %v62 = vld [vmem:[#allocation2 + $0x68] sm:$0xff]
    %v63 = vld [vmem:[#allocation2 + $0x70] sm:$0xff]
    %v64 = vld [vmem:[#allocation2 + $0x78] sm:$0xff]
    %v65 = vld [vmem:[%s1] sm:$0xff]
    %v66 = vld [vmem:[#allocation4] sm:$0xff]
    %v67 = vld [vmem:[#allocation4 + $0x8] sm:$0xff]
    %v68 = vld [vmem:[#allocation4 + $0x10] sm:$0xff]
    %v69 = vld [vmem:[#allocation4 + $0x18] sm:$0xff]
    %v70 = vld [vmem:[#allocation4 + $0x20] sm:$0xff]
    %v71 = vld [vmem:[#allocation4 + $0x28] sm:$0xff]
    %v72 = vld [vmem:[#allocation4 + $0x30] sm:$0xff]
    %v73 = vld [vmem:[#allocation4 + $0x38] sm:$0xff]
    %v74 = vld [vmem:[#allocation4 + $0x40] sm:$0xff]
    %v75 = vld [vmem:[#allocation4 + $0x48] sm:$0xff]
    %v76 = vld [vmem:[#allocation4 + $0x50] sm:$0xff]
    %v77 = vld [vmem:[#allocation4 + $0x58] sm:$0xff]
    %v78 = vld [vmem:[#allocation4 + $0x60] sm:$0xff]
    %v79 = vld [vmem:[#allocation4 + $0x68] sm:$0xff]
    %v80 = vld [vmem:[#allocation4 + $0x70] sm:$0xff]
    %v81 = vld [vmem:[#allocation4 + $0x78] sm:$0xff]
    %82 = vmatprep.subr.mxu0 0.0
    %83 = vmatpush1.xpose.msra.mxu0 %v81
    %84 = vmatprep.subr.mxu0 0.0
    %85 = vmatpush1.xpose.msra.mxu0 %v80
    %86 = vmatprep.subr.mxu0 0.0
    %87 = vmatpush1.xpose.msra.mxu0 %v79
    %88 = vmatprep.subr.mxu0 0.0
    %89 = vmatpush1.xpose.msra.mxu0 %v78
    %90 = vmatprep.subr.mxu0 0.0
    %91 = vmatpush1.xpose.msra.mxu0 %v77
    %92 = vmatprep.subr.mxu0 0.0
    %93 = vmatpush1.xpose.msra.mxu0 %v76
    %94 = vmatprep.subr.mxu0 0.0
    %95 = vmatpush1.xpose.msra.mxu0 %v75
    %96 = vmatprep.subr.mxu0 0.0
    %97 = vmatpush1.xpose.msra.mxu0 %v74
    %98 = vmatprep.subr.mxu0 0.0
    %99 = vmatpush1.xpose.msra.mxu0 %v73
    %100 = vmatprep.subr.mxu0 0.0
    %101 = vmatpush1.xpose.msra.mxu0 %v72
    %102 = vmatprep.subr.mxu0 0.0
    %103 = vmatpush1.xpose.msra.mxu0 %v71
    %104 = vmatprep.subr.mxu0 0.0
    %105 = vmatpush1.xpose.msra.mxu0 %v70
    %106 = vmatprep.subr.mxu0 0.0
    %107 = vmatpush1.xpose.msra.mxu0 %v69
    %108 = vmatprep.subr.mxu0 0.0
    %109 = vmatpush1.xpose.msra.mxu0 %v68
    %110 = vmatprep.subr.mxu0 0.0
    %111 = vmatpush1.xpose.msra.mxu0 %v67
    %112 = vmatprep.subr.mxu0 0.0
    %113 = vmatpush1.xpose.msra.mxu0 %v66
    %114 = vmatprep.subr.mxu0 0.0
    %115 = vmatpush2.xpose.msra.mxu0 0.0
    %116 = vmatprep.subr.mxu0 0.0
    %117 = vmatpush2.xpose.msra.mxu0 0.0
    %118 = vmatprep.subr.mxu0 0.0
    %119 = vmatpush2.xpose.msra.mxu0 0.0
    %120 = vmatprep.subr.mxu0 0.0
    %121 = vmatpush2.xpose.msra.mxu0 0.0
    %122 = vmatprep.subr.mxu0 0.0
    %123 = vmatpush2.xpose.msra.mxu0 0.0
    %124 = vmatprep.subr.mxu0 0.0
    %125 = vmatpush2.xpose.msra.mxu0 0.0
    %126 = vmatprep.subr.mxu0 0.0
    %127 = vmatpush2.xpose.msra.mxu0 0.0
    %128 = vmatprep.subr.mxu0 0.0
    %129 = vmatpush2.xpose.msra.mxu0 0.0
    %130 = vmatprep.subr.mxu0 0.0
    %131 = vmatpush2.xpose.msra.mxu0 0.0
    %132 = vmatprep.subr.mxu0 0.0
    %133 = vmatpush2.xpose.msra.mxu0 0.0
    %134 = vmatprep.subr.mxu0 0.0
    %135 = vmatpush2.xpose.msra.mxu0 0.0
    %136 = vmatprep.subr.mxu0 0.0
    %137 = vmatpush2.xpose.msra.mxu0 0.0
    %138 = vmatprep.subr.mxu0 0.0
    %139 = vmatpush2.xpose.msra.mxu0 0.0
    %140 = vmatprep.subr.mxu0 0.0
    %141 = vmatpush2.xpose.msra.mxu0 0.0
    %142 = vmatprep.subr.mxu0 0.0
    %143 = vmatpush2.xpose.msra.mxu0 0.0
    %144 = vmatprep.subr.mxu0 0.0
    %145 = vmatpush2.xpose.msra.mxu0 0.0
    %146 = vmatprep.mubr.f32.mxu0 0.0
    %147 = vmatmul.mubr.f32.gmra.mxu0 %v65
    %v148 = vpop.f32.mrf.mxu0
    %v149 = vadd.f32 0.0, %v148
    %v150 = vpop.f32.mrf.mxu0
    %151 = vdwg.mxu0
    %152 = vmatprep.subr.mxu0 0.0
    %153 = vmatpush1.xpose.msra.mxu0 %v64
    %154 = vmatprep.subr.mxu0 0.0
    %155 = vmatpush1.xpose.msra.mxu0 %v63
    %156 = vmatprep.subr.mxu0 0.0
    %157 = vmatpush1.xpose.msra.mxu0 %v62
    %158 = vmatprep.subr.mxu0 0.0
    %159 = vmatpush1.xpose.msra.mxu0 %v61
    %160 = vmatprep.subr.mxu0 0.0
    %161 = vmatpush1.xpose.msra.mxu0 %v60
    %162 = vmatprep.subr.mxu0 0.0
    %163 = vmatpush1.xpose.msra.mxu0 %v59
    %164 = vmatprep.subr.mxu0 0.0
    %165 = vmatpush1.xpose.msra.mxu0 %v58
    %166 = vmatprep.subr.mxu0 0.0
    %167 = vmatpush1.xpose.msra.mxu0 %v57
    %168 = vmatprep.subr.mxu0 0.0
    %169 = vmatpush1.xpose.msra.mxu0 %v56
    %170 = vmatprep.subr.mxu0 0.0
    %171 = vmatpush1.xpose.msra.mxu0 %v55
    %172 = vmatprep.subr.mxu0 0.0
    %173 = vmatpush1.xpose.msra.mxu0 %v54
    %174 = vmatprep.subr.mxu0 0.0
    %175 = vmatpush1.xpose.msra.mxu0 %v53
    %176 = vmatprep.subr.mxu0 0.0
    %177 = vmatpush1.xpose.msra.mxu0 %v52
    %178 = vmatprep.subr.mxu0 0.0
    %179 = vmatpush1.xpose.msra.mxu0 %v51
    %180 = vmatprep.subr.mxu0 0.0
    %181 = vmatpush1.xpose.msra.mxu0 %v50
    %182 = vmatprep.subr.mxu0 0.0
    %183 = vmatpush1.xpose.msra.mxu0 %v49
    %184 = vmatprep.subr.mxu0 0.0
    %185 = vmatpush2.xpose.msra.mxu0 0.0
    %186 = vmatprep.subr.mxu0 0.0
    %187 = vmatpush2.xpose.msra.mxu0 0.0
    %188 = vmatprep.subr.mxu0 0.0
    %189 = vmatpush2.xpose.msra.mxu0 0.0
    %190 = vmatprep.subr.mxu0 0.0
    %191 = vmatpush2.xpose.msra.mxu0 0.0
    %192 = vmatprep.subr.mxu0 0.0
    %193 = vmatpush2.xpose.msra.mxu0 0.0
    %194 = vmatprep.subr.mxu0 0.0
    %195 = vmatpush2.xpose.msra.mxu0 0.0
    %196 = vmatprep.subr.mxu0 0.0
    %197 = vmatpush2.xpose.msra.mxu0 0.0
    %198 = vmatprep.subr.mxu0 0.0
    %199 = vmatpush2.xpose.msra.mxu0 0.0
    %200 = vmatprep.subr.mxu0 0.0
    %201 = vmatpush2.xpose.msra.mxu0 0.0
    %202 = vmatprep.subr.mxu0 0.0
    %203 = vmatpush2.xpose.msra.mxu0 0.0
    %204 = vmatprep.subr.mxu0 0.0
    %205 = vmatpush2.xpose.msra.mxu0 0.0
    %206 = vmatprep.subr.mxu0 0.0
    %207 = vmatpush2.xpose.msra.mxu0 0.0
    %208 = vmatprep.subr.mxu0 0.0
    %209 = vmatpush2.xpose.msra.mxu0 0.0
    %210 = vmatprep.subr.mxu0 0.0
    %211 = vmatpush2.xpose.msra.mxu0 0.0
    %212 = vmatprep.subr.mxu0 0.0
    %213 = vmatpush2.xpose.msra.mxu0 0.0
    %214 = vmatprep.subr.mxu0 0.0
    %215 = vmatpush2.xpose.msra.mxu0 0.0
    %216 = vmatprep.mubr.f32.mxu0 0.0
    %217 = vmatmul.mubr.f32.gmra.mxu0 %v48
    %v218 = vpop.f32.mrf.mxu0
    %v219 = vadd.f32 %v149, %v218
    %v220 = vpop.f32.mrf.mxu0
    %221 = vdwg.mxu0
    %v222 = vld [vmem:[%s4] sm:$0x1]
    %v224 = vlaneseq
    %v225 = vshrl.u32 %v224, 7
    %v226 = vsub.s32 0, %v225
    %v227 = vrot.slane %v222, %v226
    %v229 = vadd.f32 %v219, %v227
    %v230 = vmax.f32 %v229, 0.0
    %231 = vst [vmem:[%s5] sm:$0xff] %v230
    // Predicated region
    $region30: #{intermedia_forward.1} parent=1 // pred_check
      _
    $region31: #{intermedia_forward.1} parent=1 // pred_check_branch
      %233 = sbr.rel (0) target = $region33
    $region32: #{intermedia_forward.1} parent=1 // pred_region
      _
    $region33: #{intermedia_forward.1} parent=1 // pred_fallthru
      _
    // Predicated region
    $region34: #{intermedia_forward.1} parent=1 // pred_check
      _
    $region35: #{intermedia_forward.1} parent=1 // pred_check_branch
      %235 = sbr.rel (0) target = $region37
    $region36: #{intermedia_forward.1} parent=1 // pred_region
      _
    $region37: #{intermedia_forward.1} parent=1 // pred_fallthru
      _
    %236 = vsyncpa [#allocation3], 1
    %237 = vsyncpa [#allocation5], 1

</llo_original>
